<compile_context>
chip_gen: v6e
topology: v6e:2x2x1
jax: 0.10.0
libtpu: 0.0.40
codegen_flags: <defaults>
</compile_context>

<pallas_src>
import math

import jax
import jax.numpy as jnp
from jax.experimental import pallas as pl
from jax.experimental.pallas import tpu as pltpu


def _round_up(n, m):
    return ((n + m - 1) // m) * m


def adv_net_kernel(x_ref, w1_ref, b1_ref, w2_ref, b2_ref, w3_ref, b3_ref, o_ref):
    # ad_layer1 + relu1   (dropout1 identity at inference).  bf16 MXU inputs, f32 acc.
    h1 = jnp.dot(x_ref[...], w1_ref[...], preferred_element_type=jnp.float32)
    h1 = jnp.maximum(h1 + b1_ref[...], 0.0)
    # ad_layer2 + relu2   (dropout2 identity at inference).
    h2 = jnp.dot(h1.astype(jnp.bfloat16), w2_ref[...],
                 preferred_element_type=jnp.float32)
    h2 = jnp.maximum(h2 + b2_ref[...], 0.0)
    # ad_layer3 + sigmoid: VPU multiply + XLU lane reduction against the (1, H) W3 row
    # instead of an N=1 MXU matmul.  b3 is an SMEM scalar.
    logit = jnp.sum(h2 * w3_ref[...], axis=-1, keepdims=True) + b3_ref[0]
    o_ref[...] = jax.nn.sigmoid(logit).astype(o_ref.dtype)


def adversarial_network_forward(x, params, *, block_b=512):
    """x: [B, in_feature] f32.  params: dict of W1,b1,W2,b2,W3,b3 (W stored [in, out])."""
    B, F = x.shape
    H = params["W1"].shape[1]

    # Batch tile: multiple of 8, no larger than the (rounded-up) batch.
    block_b = max(8, min(_round_up(block_b, 8), _round_up(B, 8)))
    num_tiles = pl.cdiv(B, block_b)
    B_pad = num_tiles * block_b

    # bf16 inputs for the MXU; pad ragged batch with zero rows (sliced off below).
    x_in = x.astype(jnp.bfloat16)
    if B_pad != B:
        x_in = jnp.pad(x_in, ((0, B_pad - B), (0, 0)))

    w1 = params["W1"].astype(jnp.bfloat16)
    w2 = params["W2"].astype(jnp.bfloat16)
    b1 = params["b1"].reshape(1, H).astype(jnp.float32)
    b2 = params["b2"].reshape(1, H).astype(jnp.float32)
    w3 = params["W3"].reshape(1, H).astype(jnp.float32)   # row layout for the VPU reduce
    b3 = params["b3"].reshape(1).astype(jnp.float32)       # SMEM scalar

    out = pl.pallas_call(
        adv_net_kernel,
        out_shape=jax.ShapeDtypeStruct((B_pad, 1), jnp.float32),
        grid_spec=pltpu.PrefetchScalarGridSpec(
            num_scalar_prefetch=0,
            grid=(num_tiles,),
            in_specs=[
                pl.BlockSpec((block_b, F), lambda i: (i, 0)),       # x tile (pipelined)
                pl.BlockSpec((F, H), lambda i: (0, 0)),              # W1 (resident)
                pl.BlockSpec((1, H), lambda i: (0, 0)),              # b1
                pl.BlockSpec((H, H), lambda i: (0, 0)),              # W2 (resident)
                pl.BlockSpec((1, H), lambda i: (0, 0)),              # b2
                pl.BlockSpec((1, H), lambda i: (0, 0)),              # W3 row
                pl.BlockSpec(memory_space=pltpu.MemorySpace.SMEM),   # b3 scalar
            ],
            out_specs=pl.BlockSpec((block_b, 1), lambda i: (i, 0)),
        ),
        compiler_params=pltpu.CompilerParams(
            dimension_semantics=("parallel",)),
    )(x_in, w1, b1, w2, b2, w3, b3)

    return out[:B]


def init_adv_params(key, in_feature, hidden_size):
    """Deterministic xavier_normal_ weights (as in init_weights), zero biases.
    Weights stored as [in, out] (transpose of PyTorch's [out, in])."""
    k1, k2, k3 = jax.random.split(key, 3)

    def xavier_normal(k, fan_in, fan_out):
        std = math.sqrt(2.0 / (fan_in + fan_out))
        return std * jax.random.normal(k, (fan_in, fan_out), dtype=jnp.float32)

    return {
        "W1": xavier_normal(k1, in_feature, hidden_size),
        "b1": jnp.zeros((hidden_size,), jnp.float32),
        "W2": xavier_normal(k2, hidden_size, hidden_size),
        "b2": jnp.zeros((hidden_size,), jnp.float32),
        "W3": xavier_normal(k3, hidden_size, 1),
        "b3": jnp.zeros((1,), jnp.float32),
    }


def _reference_forward(x, params):
    h1 = jnp.maximum(x @ params["W1"] + params["b1"], 0.0)
    h2 = jnp.maximum(h1 @ params["W2"] + params["b2"], 0.0)
    return jax.nn.sigmoid(h2 @ params["W3"] + params["b3"])


if __name__ == "__main__":
    # Small shapes consistent with the module; B=200 exercises the cdiv/padding path,
    # block_b=64 gives a 4-step grid (pipelining + megacore sharding).
    B, IN_FEATURE, HIDDEN = 200, 64, 64

    key = jax.random.PRNGKey(0)
    kx, kp = jax.random.split(key)
    x = jax.random.normal(kx, (B, IN_FEATURE), dtype=jnp.float32)
    params = init_adv_params(kp, IN_FEATURE, HIDDEN)

    y = adversarial_network_forward(x, params, block_b=64)
    y = jax.block_until_ready(y)

    y_ref = _reference_forward(x, params)
    assert y.shape == (B, 1)
    # bf16 MXU inputs (f32 accumulation) -> looser tolerance vs the f32 reference.
    assert jnp.allclose(y, y_ref, atol=2e-2, rtol=2e-2), float(
        jnp.max(jnp.abs(y - y_ref)))

    print("KERNEL_OK")
</pallas_src>

<mosaic_0001>
module attributes {stable_mosaic.version = 11 : i64} {
  func.func @adv_net_kernel(%arg0: i32, %arg1: memref<64x64xbf16, #tpu.memory_space<vmem>>, %arg2: memref<64x64xbf16, #tpu.memory_space<vmem>>, %arg3: memref<1x64xf32, #tpu.memory_space<vmem>>, %arg4: memref<64x64xbf16, #tpu.memory_space<vmem>>, %arg5: memref<1x64xf32, #tpu.memory_space<vmem>>, %arg6: memref<1x64xf32, #tpu.memory_space<vmem>>, %arg7: memref<1xf32, #tpu.memory_space<smem>>, %arg8: memref<64x1xf32, #tpu.memory_space<vmem>>) attributes {dimension_semantics = [#tpu.dimension_semantics<parallel>], iteration_bounds = array<i64: 4>, scalar_prefetch = 0 : i64, scratch_operands = 0 : i64, tpu.core_type = #tpu.core_type<tc>, window_params = [{transform_indices = @transform_0, window_bounds = array<i64: 64, 64>}, {pipeline_mode = #tpu.pipeline_mode<synchronous>, transform_indices = @transform_1, window_bounds = array<i64: 64, 64>}, {pipeline_mode = #tpu.pipeline_mode<synchronous>, transform_indices = @transform_2, window_bounds = array<i64: 1, 64>}, {pipeline_mode = #tpu.pipeline_mode<synchronous>, transform_indices = @transform_3, window_bounds = array<i64: 64, 64>}, {pipeline_mode = #tpu.pipeline_mode<synchronous>, transform_indices = @transform_4, window_bounds = array<i64: 1, 64>}, {pipeline_mode = #tpu.pipeline_mode<synchronous>, transform_indices = @transform_5, window_bounds = array<i64: 1, 64>}, {transform_indices = @transform_6, window_bounds = array<i64: 1>}, {transform_indices = @transform_7, window_bounds = array<i64: 64, 1>}]} {
    %c0 = arith.constant 0 : index
    %c0_0 = arith.constant 0 : index
    %0 = vector.load %arg1[%c0, %c0_0] : memref<64x64xbf16, #tpu.memory_space<vmem>>, vector<64x64xbf16>
    %c0_1 = arith.constant 0 : index
    %c0_2 = arith.constant 0 : index
    %1 = vector.load %arg2[%c0_1, %c0_2] : memref<64x64xbf16, #tpu.memory_space<vmem>>, vector<64x64xbf16>
    %cst = arith.constant dense<0.000000e+00> : vector<64x64xf32>
    %2 = tpu.matmul %0, %1, %cst {dimension_numbers = #tpu.dot_dimension_numbers<[1], [0], [0], [1], [0, 0, 1, 1], [], []>} : vector<64x64xbf16>, vector<64x64xbf16>, vector<64x64xf32> -> vector<64x64xf32>
    %c0_3 = arith.constant 0 : index
    %c0_4 = arith.constant 0 : index
    %3 = vector.load %arg3[%c0_3, %c0_4] : memref<1x64xf32, #tpu.memory_space<vmem>>, vector<1x64xf32>
    %4 = vector.broadcast %3 : vector<1x64xf32> to vector<64x64xf32>
    %5 = arith.addf %2, %4 : vector<64x64xf32>
    %cst_5 = arith.constant 0.000000e+00 : f32
    %6 = vector.broadcast %cst_5 : f32 to vector<64x64xf32>
    %7 = arith.maximumf %5, %6 : vector<64x64xf32>
    %8 = arith.truncf %7 : vector<64x64xf32> to vector<64x64xbf16>
    %c0_6 = arith.constant 0 : index
    %c0_7 = arith.constant 0 : index
    %9 = vector.load %arg4[%c0_6, %c0_7] : memref<64x64xbf16, #tpu.memory_space<vmem>>, vector<64x64xbf16>
    %cst_8 = arith.constant dense<0.000000e+00> : vector<64x64xf32>
    %10 = tpu.matmul %8, %9, %cst_8 {dimension_numbers = #tpu.dot_dimension_numbers<[1], [0], [0], [1], [0, 0, 1, 1], [], []>} : vector<64x64xbf16>, vector<64x64xbf16>, vector<64x64xf32> -> vector<64x64xf32>
    %c0_9 = arith.constant 0 : index
    %c0_10 = arith.constant 0 : index
    %11 = vector.load %arg5[%c0_9, %c0_10] : memref<1x64xf32, #tpu.memory_space<vmem>>, vector<1x64xf32>
    %12 = vector.broadcast %11 : vector<1x64xf32> to vector<64x64xf32>
    %13 = arith.addf %10, %12 : vector<64x64xf32>
    %cst_11 = arith.constant 0.000000e+00 : f32
    %14 = vector.broadcast %cst_11 : f32 to vector<64x64xf32>
    %15 = arith.maximumf %13, %14 : vector<64x64xf32>
    %c0_12 = arith.constant 0 : index
    %c0_13 = arith.constant 0 : index
    %16 = vector.load %arg6[%c0_12, %c0_13] : memref<1x64xf32, #tpu.memory_space<vmem>>, vector<1x64xf32>
    %17 = vector.broadcast %16 : vector<1x64xf32> to vector<64x64xf32>
    %18 = arith.mulf %15, %17 : vector<64x64xf32>
    %cst_14 = arith.constant dense<0.000000e+00> : vector<64xf32>
    %19 = vector.multi_reduction <add>, %18, %cst_14 [1] : vector<64x64xf32> to vector<64xf32>
    %20 = vector.shape_cast %19 : vector<64xf32> to vector<64x1xf32>
    %c0_15 = arith.constant 0 : index
    %21 = memref.load %arg7[%c0_15] : memref<1xf32, #tpu.memory_space<smem>>
    %22 = vector.broadcast %21 : f32 to vector<64x1xf32>
    %23 = arith.addf %20, %22 : vector<64x1xf32>
    %24 = arith.negf %23 : vector<64x1xf32>
    %25 = math.exp %24 : vector<64x1xf32>
    %cst_16 = arith.constant 1.000000e+00 : f32
    %26 = vector.broadcast %cst_16 : f32 to vector<64x1xf32>
    %27 = arith.addf %26, %25 : vector<64x1xf32>
    %28 = arith.divf %26, %27 : vector<64x1xf32>
    %c0_17 = arith.constant 0 : index
    %c0_18 = arith.constant 0 : index
    %29 = vector.load %arg8[%c0_17, %c0_18] : memref<64x1xf32, #tpu.memory_space<vmem>>, vector<64x1xf32>
    tpu.vector_store %arg8[%c0_17, %c0_18], %28 {strides = array<i32>} : memref<64x1xf32, #tpu.memory_space<vmem>>, vector<64x1xf32>,
    return
  }
  func.func @transform_0(%arg0: i32) -> (i32, i32) {
    %c0_i32 = arith.constant 0 : i32
    %c0_i32_0 = arith.constant 0 : i32
    return %arg0, %c0_i32 : i32, i32
  }
  func.func @transform_1(%arg0: i32) -> (i32, i32) {
    %c0_i32 = arith.constant 0 : i32
    %c0_i32_0 = arith.constant 0 : i32
    %c0_i32_1 = arith.constant 0 : i32
    return %c0_i32, %c0_i32_0 : i32, i32
  }
  func.func @transform_2(%arg0: i32) -> (i32, i32) {
    %c0_i32 = arith.constant 0 : i32
    %c0_i32_0 = arith.constant 0 : i32
    %c0_i32_1 = arith.constant 0 : i32
    return %c0_i32, %c0_i32_0 : i32, i32
  }
  func.func @transform_3(%arg0: i32) -> (i32, i32) {
    %c0_i32 = arith.constant 0 : i32
    %c0_i32_0 = arith.constant 0 : i32
    %c0_i32_1 = arith.constant 0 : i32
    return %c0_i32, %c0_i32_0 : i32, i32
  }
  func.func @transform_4(%arg0: i32) -> (i32, i32) {
    %c0_i32 = arith.constant 0 : i32
    %c0_i32_0 = arith.constant 0 : i32
    %c0_i32_1 = arith.constant 0 : i32
    return %c0_i32, %c0_i32_0 : i32, i32
  }
  func.func @transform_5(%arg0: i32) -> (i32, i32) {
    %c0_i32 = arith.constant 0 : i32
    %c0_i32_0 = arith.constant 0 : i32
    %c0_i32_1 = arith.constant 0 : i32
    return %c0_i32, %c0_i32_0 : i32, i32
  }
  func.func @transform_6(%arg0: i32) -> i32 {
    %c0_i32 = arith.constant 0 : i32
    %c0_i32_0 = arith.constant 0 : i32
    return %c0_i32 : i32
  }
  func.func @transform_7(%arg0: i32) -> (i32, i32) {
    %c0_i32 = arith.constant 0 : i32
    %c0_i32_0 = arith.constant 0 : i32
    return %arg0, %c0_i32 : i32, i32
  }
}

</mosaic_0001>

<llo_original>
// kernel: tpu_custom_call.1
$region0: #{tpu_custom_call.1}
  #allocation0 [shape = 'u32[]', space=smem, size = 0x4, offset = 0x4, fixed_abs, tag = 'smem constant byte address 0x4 - core index']
  #allocation1 [shape = 'u32[144,128]{1,0:T(1,128)}', space=vmem, size = 0x12000, scoped, tag = 'internal scratch']
  #allocation2 [shape = 'f32[1]{0:T(128)S(6)}', space=smem, size = 0x200, scoped, tag = 'scoped memory for tpu_custom_call.1']
  %s0 = inlined_call_operand.vmem [shape: bf16[256,64], index: 0, kind: input, shape index: {}]
  %s1 = inlined_call_operand.vmem [shape: bf16[64,64], index: 1, kind: input, shape index: {}]
  %s2 = inlined_call_operand.vmem [shape: f32[1,64], index: 2, kind: input, shape index: {}]
  %s3 = inlined_call_operand.vmem [shape: bf16[64,64], index: 3, kind: input, shape index: {}]
  %s4 = inlined_call_operand.vmem [shape: f32[1,64], index: 4, kind: input, shape index: {}]
  %s5 = inlined_call_operand.vmem [shape: f32[1,64], index: 5, kind: input, shape index: {}]
  %s6 = inlined_call_operand.<no memory space> [shape: f32[1], index: 6, kind: input, shape index: {}]
  %s7 = inlined_call_operand.vmem [shape: f32[256,1], index: 7, kind: output, shape index: {}]
  %s8 = sld [smem:[#allocation0]]
  $region61: #{tpu_custom_call.1} parent=0
    _
  %s10 = ssub.s32 1, %s8
  %s11 = scalar_select 0, %s10, %s8
  %12 = sst [smem:[#allocation2]] %s6
  loop: start=0, step=1, limit=6
  $region2: #{tpu_custom_call.1} parent=0 // loop_pre_header
    _
  $region3: #{tpu_custom_call.1} parent=0 // loop_header
    %s14 = sphi 0, %s18
    %p15 = scmp.ge.s32.totalorder %s14, 6
    %s24 = sphi 0, %s26
    %s27 = sphi 0, %s24
    %s28 = sphi 0, %s27
    %s44 = sphi 0, %s28
    %s48 = sphi 0, %s48
    %s50 = sphi 0, %s48
    %s51 = sphi 0, %s50
    %s65 = sphi 0, %s51
    %s69 = sphi 0, %s69
    %s71 = sphi 0, %s69
    %s72 = sphi 0, %s71
    %s86 = sphi 0, %s72
    %s90 = sphi 0, %s90
    %s92 = sphi 0, %s90
    %s93 = sphi 0, %s92
    %s107 = sphi 0, %s93
    %s111 = sphi 0, %s111
    %s113 = sphi 0, %s111
    %s114 = sphi 0, %s113
    %s128 = sphi 0, %s114
    %s132 = sphi 0, %s132
    %s134 = sphi 0, %s132
    %s135 = sphi 0, %s134
    %s149 = sphi 0, %s135
    %s153 = sphi 0, %s153
    %s155 = sphi 0, %s153
    %s156 = sphi 0, %s155
    %s170 = sphi 0, %s156
    %s176 = sphi 0, %s178
    %s179 = sphi 0, %s176
    %s180 = sphi 0, %s179
    %s196 = sphi 0, %s180
  $region4: #{tpu_custom_call.1} parent=0 // loop_header_branch
    %17 = sbr.rel (%p15) target = $region8
  $region5: #{tpu_custom_call.1} parent=0 // loop_body
    %s19 = ssub.s32 %s14, 1
    %s20 = ssub.s32 %s14, 2
    %s21 = sadd.s32 %s14, 1
    %s22 = ssub.s32 %s14, %s21
    %p23 = scmp.eq.s32.totalorder %s22, 0
    %s25 = sadd.s32 %s24, 1
    %s26 = scalar_select %p23, %s24, %s25
    %p29 = pneg %p23
    %p30 = scmp.eq.s32.totalorder %s14, 3
    %p31 = por %p29, %p30
    %p32 = scmp.ne.s32.totalorder %s24, %s27
    %p33 = scmp.eq.s32.totalorder %s14, 0
    %p34 = por %p32, %p33
    %p35 = scmp.ne.s32.totalorder %s24, %s27
    %p36 = scmp.eq.s32.totalorder %s19, 3
    %p37 = por %p35, %p36
    %p38 = scmp.ne.s32.totalorder %s27, %s28
    %p39 = scmp.eq.s32.totalorder %s19, 0
    %p40 = por %p38, %p39
    %p41 = scmp.ne.s32.totalorder %s27, %s28
    %p42 = scmp.eq.s32.totalorder %s20, 3
    %p43 = por %p41, %p42
    %p45 = scmp.ne.s32.totalorder %s28, %s44
    %p46 = scmp.eq.s32.totalorder %s20, 0
    %p47 = por %p45, %p46
    %s49 = sadd.s32 %s48, 1
    %p52 = scmp.eq.s32.totalorder %s14, 3
    %p53 = scmp.ne.s32.totalorder %s48, %s50
    %p54 = scmp.eq.s32.totalorder %s14, 0
    %p55 = por %p53, %p54
    %p56 = scmp.ne.s32.totalorder %s48, %s50
    %p57 = scmp.eq.s32.totalorder %s19, 3
    %p58 = por %p56, %p57
    %p59 = scmp.ne.s32.totalorder %s50, %s51
    %p60 = scmp.eq.s32.totalorder %s19, 0
    %p61 = por %p59, %p60
    %p62 = scmp.ne.s32.totalorder %s50, %s51
    %p63 = scmp.eq.s32.totalorder %s20, 3
    %p64 = por %p62, %p63
    %p66 = scmp.ne.s32.totalorder %s51, %s65
    %p67 = scmp.eq.s32.totalorder %s20, 0
    %p68 = por %p66, %p67
    %s70 = sadd.s32 %s69, 1
    %p73 = scmp.eq.s32.totalorder %s14, 3
    %p74 = scmp.ne.s32.totalorder %s69, %s71
    %p75 = scmp.eq.s32.totalorder %s14, 0
    %p76 = por %p74, %p75
    %p77 = scmp.ne.s32.totalorder %s69, %s71
    %p78 = scmp.eq.s32.totalorder %s19, 3
    %p79 = por %p77, %p78
    %p80 = scmp.ne.s32.totalorder %s71, %s72
    %p81 = scmp.eq.s32.totalorder %s19, 0
    %p82 = por %p80, %p81
    %p83 = scmp.ne.s32.totalorder %s71, %s72
    %p84 = scmp.eq.s32.totalorder %s20, 3
    %p85 = por %p83, %p84
    %p87 = scmp.ne.s32.totalorder %s72, %s86
    %p88 = scmp.eq.s32.totalorder %s20, 0
    %p89 = por %p87, %p88
    %s91 = sadd.s32 %s90, 1
    %p94 = scmp.eq.s32.totalorder %s14, 3
    %p95 = scmp.ne.s32.totalorder %s90, %s92
    %p96 = scmp.eq.s32.totalorder %s14, 0
    %p97 = por %p95, %p96
    %p98 = scmp.ne.s32.totalorder %s90, %s92
    %p99 = scmp.eq.s32.totalorder %s19, 3
    %p100 = por %p98, %p99
    %p101 = scmp.ne.s32.totalorder %s92, %s93
    %p102 = scmp.eq.s32.totalorder %s19, 0
    %p103 = por %p101, %p102
    %p104 = scmp.ne.s32.totalorder %s92, %s93
    %p105 = scmp.eq.s32.totalorder %s20, 3
    %p106 = por %p104, %p105
    %p108 = scmp.ne.s32.totalorder %s93, %s107
    %p109 = scmp.eq.s32.totalorder %s20, 0
    %p110 = por %p108, %p109
    %s112 = sadd.s32 %s111, 1
    %p115 = scmp.eq.s32.totalorder %s14, 3
    %p116 = scmp.ne.s32.totalorder %s111, %s113
    %p117 = scmp.eq.s32.totalorder %s14, 0
    %p118 = por %p116, %p117
    %p119 = scmp.ne.s32.totalorder %s111, %s113
    %p120 = scmp.eq.s32.totalorder %s19, 3
    %p121 = por %p119, %p120
    %p122 = scmp.ne.s32.totalorder %s113, %s114
    %p123 = scmp.eq.s32.totalorder %s19, 0
    %p124 = por %p122, %p123
    %p125 = scmp.ne.s32.totalorder %s113, %s114
    %p126 = scmp.eq.s32.totalorder %s20, 3
    %p127 = por %p125, %p126
    %p129 = scmp.ne.s32.totalorder %s114, %s128
    %p130 = scmp.eq.s32.totalorder %s20, 0
    %p131 = por %p129, %p130
    %s133 = sadd.s32 %s132, 1
    %p136 = scmp.eq.s32.totalorder %s14, 3
    %p137 = scmp.ne.s32.totalorder %s132, %s134
    %p138 = scmp.eq.s32.totalorder %s14, 0
    %p139 = por %p137, %p138
    %p140 = scmp.ne.s32.totalorder %s132, %s134
    %p141 = scmp.eq.s32.totalorder %s19, 3
    %p142 = por %p140, %p141
    %p143 = scmp.ne.s32.totalorder %s134, %s135
    %p144 = scmp.eq.s32.totalorder %s19, 0
    %p145 = por %p143, %p144
    %p146 = scmp.ne.s32.totalorder %s134, %s135
    %p147 = scmp.eq.s32.totalorder %s20, 3
    %p148 = por %p146, %p147
    %p150 = scmp.ne.s32.totalorder %s135, %s149
    %p151 = scmp.eq.s32.totalorder %s20, 0
    %p152 = por %p150, %p151
    %s154 = sadd.s32 %s153, 1
    %p157 = scmp.eq.s32.totalorder %s14, 3
    %p158 = scmp.ne.s32.totalorder %s153, %s155
    %p159 = scmp.eq.s32.totalorder %s14, 0
    %p160 = por %p158, %p159
    %p161 = scmp.ne.s32.totalorder %s153, %s155
    %p162 = scmp.eq.s32.totalorder %s19, 3
    %p163 = por %p161, %p162
    %p164 = scmp.ne.s32.totalorder %s155, %s156
    %p165 = scmp.eq.s32.totalorder %s19, 0
    %p166 = por %p164, %p165
    %p167 = scmp.ne.s32.totalorder %s155, %s156
    %p168 = scmp.eq.s32.totalorder %s20, 3
    %p169 = por %p167, %p168
    %p171 = scmp.ne.s32.totalorder %s156, %s170
    %p172 = scmp.eq.s32.totalorder %s20, 0
    %p173 = por %p171, %p172
    %s174 = ssub.s32 %s14, %s21
    %p175 = scmp.eq.s32.totalorder %s174, 0
    %s177 = sadd.s32 %s176, 1
    %s178 = scalar_select %p175, %s176, %s177
    %p181 = pneg %p175
    %p182 = scmp.eq.s32.totalorder %s14, 3
    %p183 = por %p181, %p182
    %p184 = scmp.ne.s32.totalorder %s176, %s179
    %p185 = scmp.eq.s32.totalorder %s14, 0
    %p186 = por %p184, %p185
    %p187 = scmp.ne.s32.totalorder %s176, %s179
    %p188 = scmp.eq.s32.totalorder %s19, 3
    %p189 = por %p187, %p188
    %p190 = scmp.ne.s32.totalorder %s179, %s180
    %p191 = scmp.eq.s32.totalorder %s19, 0
    %p192 = por %p190, %p191
    %p193 = scmp.ne.s32.totalorder %s179, %s180
    %p194 = scmp.eq.s32.totalorder %s20, 3
    %p195 = por %p193, %p194
    %p197 = scmp.ne.s32.totalorder %s180, %s196
    %p198 = scmp.eq.s32.totalorder %s20, 0
    %p199 = por %p197, %p198
    %p200 = scmp.le.s32.totalorder 1, %s14
    %p201 = scmp.lt.s32.totalorder %s14, 5
    %p202 = pnand %p200, %p201
    %p203 = pneg %p202
    // Predicated region
    $region9: #{tpu_custom_call.1} parent=5 // pred_check
      _
    $region10: #{tpu_custom_call.1} parent=5 // pred_check_branch
      %205 = sbr.rel (%p202) target = $region12
    $region11: #{tpu_custom_call.1} parent=5 // pred_region
      %s206 = ssub.s32 %s14, 1
      // Predicated region
      $region13: #{tpu_custom_call.1} parent=11 // pred_check
        %p207 = pneg %p61
      $region14: #{tpu_custom_call.1} parent=11 // pred_check_branch
        %209 = sbr.rel (%p207) target = $region16
      $region15: #{tpu_custom_call.1} parent=11 // pred_region
        _
      $region16: #{tpu_custom_call.1} parent=11 // pred_fallthru
        _
      // Predicated region
      $region17: #{tpu_custom_call.1} parent=11 // pred_check
        %p210 = pneg %p82
      $region18: #{tpu_custom_call.1} parent=11 // pred_check_branch
        %212 = sbr.rel (%p210) target = $region20
      $region19: #{tpu_custom_call.1} parent=11 // pred_region
        _
      $region20: #{tpu_custom_call.1} parent=11 // pred_fallthru
        _
      // Predicated region
      $region21: #{tpu_custom_call.1} parent=11 // pred_check
        %p213 = pneg %p103
      $region22: #{tpu_custom_call.1} parent=11 // pred_check_branch
        %215 = sbr.rel (%p213) target = $region24
      $region23: #{tpu_custom_call.1} parent=11 // pred_region
        _
      $region24: #{tpu_custom_call.1} parent=11 // pred_fallthru
        _
      // Predicated region
      $region25: #{tpu_custom_call.1} parent=11 // pred_check
        %p216 = pneg %p124
      $region26: #{tpu_custom_call.1} parent=11 // pred_check_branch
        %218 = sbr.rel (%p216) target = $region28
      $region27: #{tpu_custom_call.1} parent=11 // pred_region
        _
      $region28: #{tpu_custom_call.1} parent=11 // pred_fallthru
        _
      // Predicated region
      $region29: #{tpu_custom_call.1} parent=11 // pred_check
        %p219 = pneg %p145
      $region30: #{tpu_custom_call.1} parent=11 // pred_check_branch
        %221 = sbr.rel (%p219) target = $region32
      $region31: #{tpu_custom_call.1} parent=11 // pred_region
        _
      $region32: #{tpu_custom_call.1} parent=11 // pred_fallthru
        _
      // Predicated region
      $region33: #{tpu_custom_call.1} parent=11 // pred_check
        %p222 = pneg %p166
      $region34: #{tpu_custom_call.1} parent=11 // pred_check_branch
        %224 = sbr.rel (%p222) target = $region36
      $region35: #{tpu_custom_call.1} parent=11 // pred_region
        _
      $region36: #{tpu_custom_call.1} parent=11 // pred_fallthru
        _
    $region12: #{tpu_custom_call.1} parent=5 // pred_fallthru
      _
    %p225 = scmp.lt.s32.totalorder %s14, 4
    // Predicated region
    $region37: #{tpu_custom_call.1} parent=5 // pred_check
      %p226 = pneg %p225
    $region38: #{tpu_custom_call.1} parent=5 // pred_check_branch
      %228 = sbr.rel (%p226) target = $region40
    $region39: #{tpu_custom_call.1} parent=5 // pred_region
      // Predicated region
      $region41: #{tpu_custom_call.1} parent=39 // pred_check
        %p229 = pneg %p34
      $region42: #{tpu_custom_call.1} parent=39 // pred_check_branch
        %231 = sbr.rel (%p229) target = $region44
      $region43: #{tpu_custom_call.1} parent=39 // pred_region
        %s232 = smul.u32 8, %s14
        %p233 = scmp.lt.s32.totalorder %s232, 31
        %s234 = scalar_select %p233, %s232, 31
        %s235 = smul.addr %s234, 4
        %s236 = scalar_lea.vmem %s0, %s235
        %s237 = smul.u32 8, %s14
      $region44: #{tpu_custom_call.1} parent=39 // pred_fallthru
        _
    $region40: #{tpu_custom_call.1} parent=5 // pred_fallthru
      _
    %p238 = scmp.le.s32.totalorder 1, %s14
    %p239 = scmp.lt.s32.totalorder %s14, 5
    %p240 = pnand %p238, %p239
    %p241 = pneg %p240
    // Predicated region
    $region45: #{tpu_custom_call.1} parent=5 // pred_check
      _
    $region46: #{tpu_custom_call.1} parent=5 // pred_check_branch
      %243 = sbr.rel (%p240) target = $region48
    $region47: #{tpu_custom_call.1} parent=5 // pred_region
      %s244 = ssub.s32 %s14, 1
      %s245 = smul.u32 8, %s19
      %p246 = scmp.lt.s32.totalorder %s245, 31
      %s247 = scalar_select %p246, %s245, 31
      %s248 = smul.addr %s247, 4
      %s249 = scalar_lea.vmem %s0, %s248
      %p250 = pneg %p40
      %p251 = pneg %p37
      %p252 = pneg %p61
      %p253 = pneg %p58
      %p254 = pneg %p82
      %p255 = pneg %p79
      %p256 = pneg %p103
      %p257 = pneg %p100
      %p258 = pneg %p124
      %p259 = pneg %p121
      %p260 = pneg %p145
      %p261 = pneg %p142
      %p262 = pneg %p166
      %p263 = pneg %p163
      %p264 = pneg %p192
      %p265 = pneg %p189
      %s266 = smul.u32 8, %s19
      %p267 = scmp.lt.s32.totalorder %s266, 31
      %s268 = scalar_select %p267, %s266, 31
      %s269 = smul.addr %s268, 8
      %s270 = scalar_lea.vmem %s7, %s269
      %s271 = smul.u32 8, %s19
      %p272 = scmp.lt.s32.totalorder %s271, 31
      %s273 = scalar_select %p272, %s271, 31
      %s274 = smul.addr %s273, 4
      %s275 = scalar_lea.vmem %s0, %s274
      %s276 = smul.u32 8, %s19
      %s277 = smul.u32 8, %s19
      %p278 = scmp.lt.s32.totalorder %s277, 31
      %s279 = scalar_select %p278, %s277, 31
      %s280 = smul.addr %s279, 8
      %s281 = scalar_lea.vmem %s7, %s280
      %s282 = smul.u32 8, %s19
      %v284 = vld [vmem:[%s275] sm:$0xf]
      %v285 = vld [vmem:[%s275 + $0x4] sm:$0xf]
      %v286 = vld [vmem:[%s275 + $0x8] sm:$0xf]
      %v287 = vld [vmem:[%s275 + $0xc] sm:$0xf]
      %v288 = vld [vmem:[%s275 + $0x10] sm:$0xf]
      %v289 = vld [vmem:[%s275 + $0x14] sm:$0xf]
      %v290 = vld [vmem:[%s275 + $0x18] sm:$0xf]
      %v291 = vld [vmem:[%s275 + $0x1c] sm:$0xf]
      %v292 = vld [vmem:[%s1] sm:$0xf]
      %v293 = vld [vmem:[%s1 + $0x4] sm:$0xf]
      %v294 = vld [vmem:[%s1 + $0x8] sm:$0xf]
      %v295 = vld [vmem:[%s1 + $0xc] sm:$0xf]
      %v296 = vld [vmem:[%s1 + $0x10] sm:$0xf]
      %v297 = vld [vmem:[%s1 + $0x14] sm:$0xf]
      %v298 = vld [vmem:[%s1 + $0x18] sm:$0xf]
      %v299 = vld [vmem:[%s1 + $0x1c] sm:$0xf]
      %v300 = vld [vmem:[%s2] sm:$0x1]
      %v302 = vlaneseq
      %v303 = vshrl.u32 %v302, 7
      %v304 = vsub.s32 0, %v303
      %v305 = vrot.slane %v300, %v304
      %v315 = vunpack.c.l.b16 %v284
      %v316 = vunpack.c.l.b16 %v285
      %v317 = vunpack.c.l.b16 %v286
      %v318 = vunpack.c.l.b16 %v287
      %v319 = vunpack.c.l.b16 %v288
      %v320 = vunpack.c.l.b16 %v289
      %v321 = vunpack.c.l.b16 %v290
      %v322 = vunpack.c.l.b16 %v291
      %v323 = vpack.c.b16 %v316, %v315
      %v324 = vpack.c.b16 %v318, %v317
      %v325 = vpack.c.b16 %v320, %v319
      %v326 = vpack.c.b16 %v322, %v321
      %v335 = vunpack.c.l.b16 %v292
      %v336 = vunpack.c.l.b16 %v293
      %v337 = vunpack.c.l.b16 %v294
      %v338 = vunpack.c.l.b16 %v295
      %v339 = vunpack.c.l.b16 %v296
      %v340 = vunpack.c.l.b16 %v297
      %v341 = vunpack.c.l.b16 %v298
      %v342 = vunpack.c.l.b16 %v299
      %v343 = vpack.c.b16 %v336, %v335
      %v344 = vpack.c.b16 %v338, %v337
      %v345 = vpack.c.b16 %v340, %v339
      %v346 = vpack.c.b16 %v342, %v341
      %vm351 = vcmask 523264
      %v353 = vsel %vm351, %v323, 0
      %v356 = vsel %vm351, %v324, 0
      %v359 = vsel %vm351, %v325, 0
      %v362 = vsel %vm351, %v326, 0
      %364 = vmatprep.subr.bf16.mxu0 0
      %365 = vmatpush1.bf16.msra.mxu0 0
      %366 = vmatprep.subr.bf16.mxu0 0
      %367 = vmatpush1.bf16.msra.mxu0 0
      %368 = vmatprep.subr.bf16.mxu0 0
      %369 = vmatpush1.bf16.msra.mxu0 0
      %370 = vmatprep.subr.bf16.mxu0 0
      %371 = vmatpush1.bf16.msra.mxu0 0
      %372 = vmatprep.subr.bf16.mxu0 0
      %373 = vmatpush1.bf16.msra.mxu0 %v346
      %374 = vmatprep.subr.bf16.mxu0 0
      %375 = vmatpush1.bf16.msra.mxu0 %v345
      %376 = vmatprep.subr.bf16.mxu0 0
      %377 = vmatpush1.bf16.msra.mxu0 %v344
      %378 = vmatprep.subr.bf16.mxu0 0
      %379 = vmatpush1.bf16.msra.mxu0 %v343
      %380 = vmatprep.subr.bf16.mxu0 0
      %381 = vmatpush2.bf16.msra.mxu0 0
      %382 = vmatprep.subr.bf16.mxu0 0
      %383 = vmatpush2.bf16.msra.mxu0 0
      %384 = vmatprep.subr.bf16.mxu0 0
      %385 = vmatpush2.bf16.msra.mxu0 0
      %386 = vmatprep.subr.bf16.mxu0 0
      %387 = vmatpush2.bf16.msra.mxu0 0
      %388 = vmatprep.subr.bf16.mxu0 0
      %389 = vmatpush2.bf16.msra.mxu0 0
      %390 = vmatprep.subr.bf16.mxu0 0
      %391 = vmatpush2.bf16.msra.mxu0 0
      %392 = vmatprep.subr.bf16.mxu0 0
      %393 = vmatpush2.bf16.msra.mxu0 0
      %394 = vmatprep.subr.bf16.mxu0 0
      %395 = vmatpush2.bf16.msra.mxu0 0
      %396 = vmatprep.mubr.bf16.mxu0 0
      %397 = vmatmul.mubr.bf16.gmra.mxu0 %v353
      %v398 = vpop.f32.mrf.mxu0
      %v399 = vadd.f32 %v305, %v398
      %v400 = vpop.f32.mrf.mxu0
      %v401 = vpop.f32.mrf.mxu0
      %v402 = vadd.f32 %v305, %v401
      %v403 = vpop.f32.mrf.mxu0
      %404 = vmatprep.mubr.bf16.mxu0 0
      %405 = vmatmul.mubr.bf16.gmra.mxu0 %v356
      %v406 = vpop.f32.mrf.mxu0
      %v407 = vadd.f32 %v305, %v406
      %v408 = vpop.f32.mrf.mxu0
      %v409 = vpop.f32.mrf.mxu0
      %v410 = vadd.f32 %v305, %v409
      %v411 = vpop.f32.mrf.mxu0
      %412 = vmatprep.mubr.bf16.mxu0 0
      %413 = vmatmul.mubr.bf16.gmra.mxu0 %v359
      %v414 = vpop.f32.mrf.mxu0
      %v415 = vadd.f32 %v305, %v414
      %v416 = vpop.f32.mrf.mxu0
      %v417 = vpop.f32.mrf.mxu0
      %v418 = vadd.f32 %v305, %v417
      %v419 = vpop.f32.mrf.mxu0
      %420 = vmatprep.mubr.bf16.mxu0 0
      %421 = vmatmul.mubr.bf16.gmra.mxu0 %v362
      %v422 = vpop.f32.mrf.mxu0
      %v423 = vadd.f32 %v305, %v422
      %v424 = vpop.f32.mrf.mxu0
      %v425 = vpop.f32.mrf.mxu0
      %v426 = vadd.f32 %v305, %v425
      %v427 = vpop.f32.mrf.mxu0
      %428 = vdwg.mxu0
      %v429 = vmax.f32 %v399, 0.0
      %v430 = vmax.f32 %v402, 0.0
      %v431 = vmax.f32 %v407, 0.0
      %v432 = vmax.f32 %v410, 0.0
      %v433 = vmax.f32 %v415, 0.0
      %v434 = vmax.f32 %v418, 0.0
      %v435 = vmax.f32 %v423, 0.0
      %v436 = vmax.f32 %v426, 0.0
      %v437 = vpack.c.bf16 %v430, %v429
      %v438 = vpack.c.bf16 %v432, %v431
      %v439 = vpack.c.bf16 %v434, %v433
      %v440 = vpack.c.bf16 %v436, %v435
      %v441 = vld [vmem:[%s3] sm:$0xf]
      %v442 = vld [vmem:[%s3 + $0x4] sm:$0xf]
      %v443 = vld [vmem:[%s3 + $0x8] sm:$0xf]
      %v444 = vld [vmem:[%s3 + $0xc] sm:$0xf]
      %v445 = vld [vmem:[%s3 + $0x10] sm:$0xf]
      %v446 = vld [vmem:[%s3 + $0x14] sm:$0xf]
      %v447 = vld [vmem:[%s3 + $0x18] sm:$0xf]
      %v448 = vld [vmem:[%s3 + $0x1c] sm:$0xf]
      %v449 = vld [vmem:[%s4] sm:$0x1]
      %v451 = vlaneseq
      %v452 = vshrl.u32 %v451, 7
      %v453 = vsub.s32 0, %v452
      %v454 = vrot.slane %v449, %v453
      %v464 = vunpack.c.l.b16 %v441
      %v465 = vunpack.c.l.b16 %v442
      %v466 = vunpack.c.l.b16 %v443
      %v467 = vunpack.c.l.b16 %v444
      %v468 = vunpack.c.l.b16 %v445
      %v469 = vunpack.c.l.b16 %v446
      %v470 = vunpack.c.l.b16 %v447
      %v471 = vunpack.c.l.b16 %v448
      %v472 = vpack.c.b16 %v465, %v464
      %v473 = vpack.c.b16 %v467, %v466
      %v474 = vpack.c.b16 %v469, %v468
      %v475 = vpack.c.b16 %v471, %v470
      %v481 = vsel %vm351, %v437, 0
      %v484 = vsel %vm351, %v438, 0
      %v487 = vsel %vm351, %v439, 0
      %v490 = vsel %vm351, %v440, 0
      %492 = vmatprep.subr.bf16.mxu0 0
      %493 = vmatpush1.bf16.msra.mxu0 0
      %494 = vmatprep.subr.bf16.mxu0 0
      %495 = vmatpush1.bf16.msra.mxu0 0
      %496 = vmatprep.subr.bf16.mxu0 0
      %497 = vmatpush1.bf16.msra.mxu0 0
      %498 = vmatprep.subr.bf16.mxu0 0
      %499 = vmatpush1.bf16.msra.mxu0 0
      %500 = vmatprep.subr.bf16.mxu0 0
      %501 = vmatpush1.bf16.msra.mxu0 %v475
      %502 = vmatprep.subr.bf16.mxu0 0
      %503 = vmatpush1.bf16.msra.mxu0 %v474
      %504 = vmatprep.subr.bf16.mxu0 0
      %505 = vmatpush1.bf16.msra.mxu0 %v473
      %506 = vmatprep.subr.bf16.mxu0 0
      %507 = vmatpush1.bf16.msra.mxu0 %v472
      %508 = vmatprep.subr.bf16.mxu0 0
      %509 = vmatpush2.bf16.msra.mxu0 0
      %510 = vmatprep.subr.bf16.mxu0 0
      %511 = vmatpush2.bf16.msra.mxu0 0
      %512 = vmatprep.subr.bf16.mxu0 0
      %513 = vmatpush2.bf16.msra.mxu0 0
      %514 = vmatprep.subr.bf16.mxu0 0
      %515 = vmatpush2.bf16.msra.mxu0 0
      %516 = vmatprep.subr.bf16.mxu0 0
      %517 = vmatpush2.bf16.msra.mxu0 0
      %518 = vmatprep.subr.bf16.mxu0 0
      %519 = vmatpush2.bf16.msra.mxu0 0
      %520 = vmatprep.subr.bf16.mxu0 0
      %521 = vmatpush2.bf16.msra.mxu0 0
      %522 = vmatprep.subr.bf16.mxu0 0
      %523 = vmatpush2.bf16.msra.mxu0 0
      %524 = vmatprep.mubr.bf16.mxu0 0
      %525 = vmatmul.mubr.bf16.gmra.mxu0 %v481
      %v526 = vpop.f32.mrf.mxu0
      %v527 = vadd.f32 %v454, %v526
      %v528 = vpop.f32.mrf.mxu0
      %v529 = vpop.f32.mrf.mxu0
      %v530 = vadd.f32 %v454, %v529
      %v531 = vpop.f32.mrf.mxu0
      %532 = vmatprep.mubr.bf16.mxu0 0
      %533 = vmatmul.mubr.bf16.gmra.mxu0 %v484
      %v534 = vpop.f32.mrf.mxu0
      %v535 = vadd.f32 %v454, %v534
      %v536 = vpop.f32.mrf.mxu0
      %v537 = vpop.f32.mrf.mxu0
      %v538 = vadd.f32 %v454, %v537
      %v539 = vpop.f32.mrf.mxu0
      %540 = vmatprep.mubr.bf16.mxu0 0
      %541 = vmatmul.mubr.bf16.gmra.mxu0 %v487
      %v542 = vpop.f32.mrf.mxu0
      %v543 = vadd.f32 %v454, %v542
      %v544 = vpop.f32.mrf.mxu0
      %v545 = vpop.f32.mrf.mxu0
      %v546 = vadd.f32 %v454, %v545
      %v547 = vpop.f32.mrf.mxu0
      %548 = vmatprep.mubr.bf16.mxu0 0
      %549 = vmatmul.mubr.bf16.gmra.mxu0 %v490
      %v550 = vpop.f32.mrf.mxu0
      %v551 = vadd.f32 %v454, %v550
      %v552 = vpop.f32.mrf.mxu0
      %v553 = vpop.f32.mrf.mxu0
      %v554 = vadd.f32 %v454, %v553
      %v555 = vpop.f32.mrf.mxu0
      %556 = vdwg.mxu0
      %v557 = vmax.f32 %v527, 0.0
      %v558 = vmax.f32 %v530, 0.0
      %v559 = vmax.f32 %v535, 0.0
      %v560 = vmax.f32 %v538, 0.0
      %v561 = vmax.f32 %v543, 0.0
      %v562 = vmax.f32 %v546, 0.0
      %v563 = vmax.f32 %v551, 0.0
      %v564 = vmax.f32 %v554, 0.0
      %v565 = vld [vmem:[%s5] sm:$0x1]
      %v567 = vlaneseq
      %v568 = vshrl.u32 %v567, 7
      %v569 = vsub.s32 0, %v568
      %v570 = vrot.slane %v565, %v569
      %v572 = vmul.f32 %v557, %v570
      %v573 = vmul.f32 %v558, %v570
      %v574 = vmul.f32 %v559, %v570
      %v575 = vmul.f32 %v560, %v570
      %v576 = vmul.f32 %v561, %v570
      %v577 = vmul.f32 %v562, %v570
      %v578 = vmul.f32 %v563, %v570
      %v579 = vmul.f32 %v564, %v570
      %v580 = vsel %vm351, %v572, 0.0
      %581 = vadd.xlane.f32.xlu0 %v580
      %v582 = vpop.xlane.xlu0 %581
      %v583 = vsel %vm351, %v573, 0.0
      %584 = vadd.xlane.f32.xlu0 %v583
      %v585 = vpop.xlane.xlu0 %584
      %v586 = vsel %vm351, %v574, 0.0
      %587 = vadd.xlane.f32.xlu0 %v586
      %v588 = vpop.xlane.xlu0 %587
      %v589 = vsel %vm351, %v575, 0.0
      %590 = vadd.xlane.f32.xlu0 %v589
      %v591 = vpop.xlane.xlu0 %590
      %v592 = vsel %vm351, %v576, 0.0
      %593 = vadd.xlane.f32.xlu0 %v592
      %v594 = vpop.xlane.xlu0 %593
      %v595 = vsel %vm351, %v577, 0.0
      %596 = vadd.xlane.f32.xlu0 %v595
      %v597 = vpop.xlane.xlu0 %596
      %v598 = vsel %vm351, %v578, 0.0
      %599 = vadd.xlane.f32.xlu0 %v598
      %v600 = vpop.xlane.xlu0 %599
      %v601 = vsel %vm351, %v579, 0.0
      %602 = vadd.xlane.f32.xlu0 %v601
      %v603 = vpop.xlane.xlu0 %602
      %s604 = sld [smem:[#allocation2]]
      %v605 = vstv %s604
      %v606 = vadd.f32 %v582, %v605
      %v607 = vadd.f32 %v585, %v605
      %v608 = vadd.f32 %v588, %v605
      %v609 = vadd.f32 %v591, %v605
      %v610 = vadd.f32 %v594, %v605
      %v611 = vadd.f32 %v597, %v605
      %v612 = vadd.f32 %v600, %v605
      %v613 = vadd.f32 %v603, %v605
      %v614 = vxor.u32 %v606, 2147483648
      %v615 = vxor.u32 %v607, 2147483648
      %v616 = vxor.u32 %v608, 2147483648
      %v617 = vxor.u32 %v609, 2147483648
      %v618 = vxor.u32 %v610, 2147483648
      %v619 = vxor.u32 %v611, 2147483648
      %v620 = vxor.u32 %v612, 2147483648
      %v621 = vxor.u32 %v613, 2147483648
      %v622 = vmul.f32 %v614, 1.442695
      %v623 = vpow.pop %v622
      %v624 = vmul.f32 %v615, 1.442695
      %v625 = vpow.pop %v624
      %v626 = vmul.f32 %v616, 1.442695
      %v627 = vpow.pop %v626
      %v628 = vmul.f32 %v617, 1.442695
      %v629 = vpow.pop %v628
      %v630 = vmul.f32 %v618, 1.442695
      %v631 = vpow.pop %v630
      %v632 = vmul.f32 %v619, 1.442695
      %v633 = vpow.pop %v632
      %v634 = vmul.f32 %v620, 1.442695
      %v635 = vpow.pop %v634
      %v636 = vmul.f32 %v621, 1.442695
      %v637 = vpow.pop %v636
      %v638 = vadd.f32 %v623, 1.0
      %v639 = vadd.f32 %v625, 1.0
      %v640 = vadd.f32 %v627, 1.0
      %v641 = vadd.f32 %v629, 1.0
      %v642 = vadd.f32 %v631, 1.0
      %v643 = vadd.f32 %v633, 1.0
      %v644 = vadd.f32 %v635, 1.0
      %v645 = vadd.f32 %v637, 1.0
      %v646 = vrcp.pop %v638
      %v647 = vmul.f32 1.0, %v646
      %v648 = vrcp.pop %v639
      %v649 = vmul.f32 1.0, %v648
      %v650 = vrcp.pop %v640
      %v651 = vmul.f32 1.0, %v650
      %v652 = vrcp.pop %v641
      %v653 = vmul.f32 1.0, %v652
      %v654 = vrcp.pop %v642
      %v655 = vmul.f32 1.0, %v654
      %v656 = vrcp.pop %v643
      %v657 = vmul.f32 1.0, %v656
      %v658 = vrcp.pop %v644
      %v659 = vmul.f32 1.0, %v658
      %v660 = vrcp.pop %v645
      %v661 = vmul.f32 1.0, %v660
      %vm662 = vcmask 7168
      %663 = vst.msk [vmem:[%s281] sm:$0xff] %vm662, %v647
      %664 = vst.msk [vmem:[%s281 + $0x8] sm:$0xff] %vm662, %v649
      %665 = vst.msk [vmem:[%s281 + $0x10] sm:$0xff] %vm662, %v651
      %666 = vst.msk [vmem:[%s281 + $0x18] sm:$0xff] %vm662, %v653
      %667 = vst.msk [vmem:[%s281 + $0x20] sm:$0xff] %vm662, %v655
      %668 = vst.msk [vmem:[%s281 + $0x28] sm:$0xff] %vm662, %v657
      %669 = vst.msk [vmem:[%s281 + $0x30] sm:$0xff] %vm662, %v659
      %670 = vst.msk [vmem:[%s281 + $0x38] sm:$0xff] %vm662, %v661
      %s671 = smul.u32 8, %s19
      %p672 = scmp.lt.s32.totalorder %s671, 31
      %s673 = scalar_select %p672, %s671, 31
      %s674 = smul.addr %s673, 8
      %s675 = scalar_lea.vmem %s7, %s674
      // Predicated region
      $region49: #{tpu_custom_call.1} parent=47 // pred_check
        %p676 = pneg %p189
      $region50: #{tpu_custom_call.1} parent=47 // pred_check_branch
        %678 = sbr.rel (%p676) target = $region52
      $region51: #{tpu_custom_call.1} parent=47 // pred_region
        %s679 = smul.u32 8, %s19
      $region52: #{tpu_custom_call.1} parent=47 // pred_fallthru
        _
    $region48: #{tpu_custom_call.1} parent=5 // pred_fallthru
      _
    %p680 = scmp.le.s32.totalorder 2, %s14
    // Predicated region
    $region53: #{tpu_custom_call.1} parent=5 // pred_check
      %p681 = pneg %p680
    $region54: #{tpu_custom_call.1} parent=5 // pred_check_branch
      %683 = sbr.rel (%p681) target = $region56
    $region55: #{tpu_custom_call.1} parent=5 // pred_region
      %s684 = ssub.s32 %s14, 2
      // Predicated region
      $region57: #{tpu_custom_call.1} parent=55 // pred_check
        %p685 = pneg %p195
      $region58: #{tpu_custom_call.1} parent=55 // pred_check_branch
        %687 = sbr.rel (%p685) target = $region60
      $region59: #{tpu_custom_call.1} parent=55 // pred_region
        %s688 = smul.u32 8, %s20
        %p689 = scmp.lt.s32.totalorder %s688, 31
        %s690 = scalar_select %p689, %s688, 31
        %s691 = smul.addr %s690, 8
        %s692 = scalar_lea.vmem %s7, %s691
      $region60: #{tpu_custom_call.1} parent=55 // pred_fallthru
        _
    $region56: #{tpu_custom_call.1} parent=5 // pred_fallthru
      _
  $region6: #{tpu_custom_call.1} parent=0 // loop_footer
    %s18 = sadd.s32 1, %s14
  $region7: #{tpu_custom_call.1} parent=0 // loop_footer_branch
    %13 = sbr.rel target = $region3
  $region8: #{tpu_custom_call.1} parent=0 // loop_exit
    _

</llo_original>
